<compile_context>
chip_gen: v5e
topology: v5e:2x2
jax: 0.10.0
libtpu: 0.0.40
codegen_flags: <defaults>
</compile_context>

<pallas_src>
import jax
import jax.numpy as jnp
import numpy as np
from jax.experimental import pallas as pl
from jax.experimental.pallas import tpu as pltpu

LANES = 128                       # padded class/lane width of the fused output slab
_WEIGHT_PIPE = pl.Buffered(1)     # single-buffer invariant weight blocks


def _round_up(x, m):
    return (x + m - 1) // m * m


def _cdiv(a, b):
    return -(-a // b)


def _vmem_bytes(tile_n, hp, wbytes):
    """Conservative per-step VMEM working-set estimate (bytes)."""
    act = 2 * tile_n * hp * 4            # enc tile, double-buffered f32
    act += 2 * 8 * hp * 4                # per-batch bias block (sublane padded)
    act += 2 * tile_n * LANES * 4        # output slab, double-buffered
    wts = hp * hp * wbytes + hp * LANES * wbytes + 2 * hp * 4 + 8 * LANES * 4
    tmp = 6 * tile_n * hp * 4            # h / hn / temporaries headroom
    return act + wts + tmp


def _pick_tile_rows(n, hp, wbytes):
    """Largest row tile (<=512, multiple of 8) that fits a ~40 MiB VMEM budget."""
    n_tiles = max(1, _cdiv(n, 512))
    tile = _round_up(_cdiv(n, n_tiles), 8)
    while tile > 8 and _vmem_bytes(tile, hp, wbytes) > 40 * 2**20:
        n_tiles *= 2
        tile = _round_up(_cdiv(n, n_tiles), 8)
    return tile


# ------------------------- one-time parameter packing ------------------------
def prepare_division_params(params, matmul_dtype=jnp.bfloat16):
    """Repack FFN weights once at load time (NOT per forward call).

    - W1 is split: rows [0, H) (encoded-number part, feature-padded to Hp) go to
      the kernel in `matmul_dtype`; rows [H, 4H) stay f32 for the hoisted
      per-batch bias matmul done by XLA.
    - LayerNorm gamma/beta are packed into one (2, Hp) block.
    - W2 / b2 are zero-padded to 128 output lanes (lane-dense unmasked stores).
    """
    f32 = jnp.float32
    w1 = jnp.asarray(params["w1"], f32)                       # (4H, H)
    in_h, h = w1.shape
    assert in_h == 4 * h, "expected use_heavy_postnet=False layout (4H, H)"
    hp = _round_up(max(h, LANES), LANES)

    w1a = jnp.zeros((hp, hp), f32).at[:h, :h].set(w1[:h]).astype(matmul_dtype)
    ln = jnp.zeros((2, hp), f32)
    ln = ln.at[0, :h].set(jnp.asarray(params["ln_g"], f32).reshape(h))
    ln = ln.at[1, :h].set(jnp.asarray(params["ln_b"], f32).reshape(h))
    w2 = jnp.zeros((hp, LANES), f32).at[:h, :4].set(
        jnp.asarray(params["w2"], f32)).astype(matmul_dtype)
    b2 = jnp.zeros((1, LANES), f32).at[:, :4].set(
        jnp.asarray(params["b2"], f32).reshape(1, 4))
    return {
        "w1a": w1a,                                           # (Hp, Hp)  matmul dtype
        "w1_tail": w1[h:],                                    # (3H, H)   f32
        "b1": jnp.asarray(params["b1"], f32).reshape(1, h),   # (1, H)    f32
        "ln": ln,                                             # (2, Hp)   f32
        "w2": w2,                                             # (Hp, 128) matmul dtype
        "b2": b2,                                             # (1, 128)  f32
    }


# ----------------------------- Pallas kernel ---------------------------------
def _make_kernel(h_valid: int, hp: int):
    inv_h = 1.0 / float(h_valid)

    def kernel(enc_ref, bias_ref, w1_ref, ln_ref, w2_ref, b2_ref, out_ref):
        # enc_ref:  (1, TILE_N, Hp) f32     bias_ref: (1, 1, Hp) f32
        # w1_ref:   (Hp, Hp)                ln_ref:   (2, Hp) f32
        # w2_ref:   (Hp, 128)               b2_ref:   (1, 128) f32
        # out_ref:  (1, TILE_N, 128) f32    lanes 0..3 = log_probs, lane 4 = sign
        enc = enc_ref[0].astype(w1_ref.dtype)                 # (TILE_N, Hp)
        h = jnp.dot(enc, w1_ref[...], preferred_element_type=jnp.float32)
        h = h + bias_ref[0]                                   # per-batch bias broadcast

        # GELU (tanh approximation)
        g = 0.5 * h * (1.0 + jnp.tanh(0.7978845608028654 * (h + 0.044715 * h * h * h)))

        # LayerNorm over the true feature width (padded columns of g are exactly 0).
        mu = jnp.sum(g, axis=-1, keepdims=True) * inv_h
        d = g - mu
        if hp != h_valid:
            col = jax.lax.broadcasted_iota(jnp.int32, g.shape, 1)
            d = jnp.where(col < h_valid, d, 0.0)
        var = jnp.sum(d * d, axis=-1, keepdims=True) * inv_h
        hn = (g - mu) * jax.lax.rsqrt(var + 1e-5)
        hn = hn * ln_ref[0:1, :] + ln_ref[1:2, :]

        # Output projection into a lane-dense 128-wide slab (lanes 0..3 meaningful).
        logits = jnp.dot(hn.astype(w2_ref.dtype), w2_ref[...],
                         preferred_element_type=jnp.float32) + b2_ref[...]

        lane = jax.lax.broadcasted_iota(jnp.int32, logits.shape, 1)
        valid = lane < 4
        masked = jnp.where(valid, logits, jnp.float32(-1e30))

        # log_softmax over the 4 valid lanes.
        m = jnp.max(masked, axis=-1, keepdims=True)
        lse = m + jnp.log(jnp.sum(jnp.exp(masked - m), axis=-1, keepdims=True))
        logp = logits - lse                       # padded lanes hold junk; sliced outside

        # argmax over the 4 classes from the raw logits (same result, first-max tiebreak).
        best = jnp.min(jnp.where(masked >= m, lane, LANES), axis=-1, keepdims=True)

        out_ref[0] = jnp.where(lane == 4, best.astype(jnp.float32), logp)

    return kernel


# -------------------------------- wrapper -------------------------------------
@jax.jit
def division_block_forward(encoded_numbers, question_hidden, passage_hidden,
                           sequence_output, number_mask, prepared):
    f32 = jnp.float32
    B, N, H = encoded_numbers.shape
    Hp = prepared["w1a"].shape[0]

    # Hoisted per-batch bias: cat([q, p, cls], -1) @ W1[H:4H] + b1   -> (B, 1, Hp)
    cls = sequence_output[:, 0]
    qpc = jnp.concatenate([question_hidden, passage_hidden, cls], axis=-1).astype(f32)
    qpc = qpc @ prepared["w1_tail"] + prepared["b1"]
    qpc = jnp.pad(qpc, ((0, 0), (0, Hp - H)))[:, None, :]

    wbytes = jnp.dtype(prepared["w1a"].dtype).itemsize
    TILE_N = _pick_tile_rows(N, Hp, wbytes)
    N_pad = _round_up(N, TILE_N)
    enc = jnp.pad(encoded_numbers.astype(f32),
                  ((0, 0), (0, N_pad - N), (0, Hp - H)))      # (B, N_pad, Hp)

    grid = (B, N_pad // TILE_N)
    in_specs = [
        pl.BlockSpec((1, TILE_N, Hp), lambda b, j: (b, j, 0)),             # enc tile
        pl.BlockSpec((1, 1, Hp), lambda b, j: (b, 0, 0)),                  # per-batch bias
        pl.BlockSpec((Hp, Hp), lambda b, j: (0, 0),
                     pipeline_mode=_WEIGHT_PIPE),                          # W1[:H,:] padded
        pl.BlockSpec((2, Hp), lambda b, j: (0, 0),
                     pipeline_mode=_WEIGHT_PIPE),                          # LN gamma/beta
        pl.BlockSpec((Hp, LANES), lambda b, j: (0, 0),
                     pipeline_mode=_WEIGHT_PIPE),                          # W2 padded
        pl.BlockSpec((1, LANES), lambda b, j: (0, 0),
                     pipeline_mode=_WEIGHT_PIPE),                          # b2 padded
    ]
    out_specs = pl.BlockSpec((1, TILE_N, LANES), lambda b, j: (b, j, 0))
    out_shape = jax.ShapeDtypeStruct((B, N_pad, LANES), f32)

    vmem_limit = int(min(60 * 2**20,
                         max(32 * 2**20, 2 * _vmem_bytes(TILE_N, Hp, wbytes))))

    out = pl.pallas_call(
        _make_kernel(H, Hp),
        out_shape=out_shape,
        grid=grid,
        in_specs=in_specs,
        out_specs=out_specs,
        compiler_params=pltpu.CompilerParams(
            dimension_semantics=("parallel", "parallel"),
            vmem_limit_bytes=vmem_limit),
    )(enc, qpc, prepared["w1a"], prepared["ln"], prepared["w2"], prepared["b2"])

    log_probs = out[:, :N, :4]                                 # (B, N, 4)
    best = out[:, :N, 4].astype(jnp.int32)                     # (B, N)
    best_signs = jnp.where(number_mask != 0, best, -1)
    return log_probs, best_signs


# ----------------------------- pure-JAX reference -----------------------------
def _reference(encoded_numbers, question_hidden, passage_hidden,
               sequence_output, number_mask, params):
    B, N, H = encoded_numbers.shape
    x = jnp.concatenate(
        [encoded_numbers,
         jnp.repeat(question_hidden[:, None, :], N, 1),
         jnp.repeat(passage_hidden[:, None, :], N, 1),
         jnp.repeat(sequence_output[:, 0][:, None, :], N, 1)], axis=-1)
    h = x @ params["w1"] + params["b1"]
    h = 0.5 * h * (1.0 + jnp.tanh(0.7978845608028654 * (h + 0.044715 * h ** 3)))
    mu = jnp.mean(h, -1, keepdims=True)
    var = jnp.mean((h - mu) ** 2, -1, keepdims=True)
    hn = (h - mu) * jax.lax.rsqrt(var + 1e-5) * params["ln_g"] + params["ln_b"]
    logits = hn @ params["w2"] + params["b2"]
    logp = jax.nn.log_softmax(logits, -1)
    best = jnp.argmax(logp, -1).astype(jnp.int32)
    best = jnp.where(number_mask != 0, best, -1)
    return logp, best


# ------------------------------------ main -------------------------------------
if __name__ == "__main__":
    B, N, S, H = 2, 8, 8, 32          # batch, #numbers, seq len, hidden_size
    IN_H = 4 * H                      # use_heavy_postnet = False

    key = jax.random.PRNGKey(0)
    ks = jax.random.split(key, 10)

    encoded_numbers = jax.random.normal(ks[0], (B, N, H), jnp.float32)
    question_hidden = jax.random.normal(ks[1], (B, H), jnp.float32)
    passage_hidden = jax.random.normal(ks[2], (B, H), jnp.float32)
    sequence_output = jax.random.normal(ks[3], (B, S, H), jnp.float32)
    number_mask = (jax.random.uniform(ks[4], (B, N)) > 0.3).astype(jnp.int32)

    params = {
        "w1": 0.05 * jax.random.normal(ks[5], (IN_H, H), jnp.float32),
        "b1": jnp.zeros((1, H), jnp.float32),
        "ln_g": jnp.ones((1, H), jnp.float32),
        "ln_b": jnp.zeros((1, H), jnp.float32),
        "w2": 0.05 * jax.random.normal(ks[6], (H, 4), jnp.float32),
        "b2": jnp.zeros((1, 4), jnp.float32),
    }

    ref_logp, ref_signs = _reference(encoded_numbers, question_hidden, passage_hidden,
                                     sequence_output, number_mask, params)
    ref_logp = np.asarray(ref_logp)
    ref_signs = np.asarray(ref_signs)
    mask_np = np.asarray(number_mask)

    # ---- exact-math path (f32 MXU operands): original tight checks ----
    prep_f32 = prepare_division_params(params, matmul_dtype=jnp.float32)
    lp, bs = division_block_forward(encoded_numbers, question_hidden, passage_hidden,
                                    sequence_output, number_mask, prep_f32)
    jax.block_until_ready((lp, bs))
    np.testing.assert_allclose(np.asarray(lp), ref_logp, rtol=1e-4, atol=1e-4)
    assert np.array_equal(np.asarray(bs), ref_signs)

    # ---- fast path (bf16 MXU operands, f32 accumulate): relaxed tolerance ----
    prep_bf16 = prepare_division_params(params, matmul_dtype=jnp.bfloat16)
    lp16, bs16 = division_block_forward(encoded_numbers, question_hidden, passage_hidden,
                                        sequence_output, number_mask, prep_bf16)
    jax.block_until_ready((lp16, bs16))
    lp16_np, bs16_np = np.asarray(lp16), np.asarray(bs16)
    np.testing.assert_allclose(lp16_np, ref_logp, rtol=3e-2, atol=3e-2)
    # argmax must be self-consistent with the returned log_probs ...
    self_signs = np.where(mask_np != 0, np.argmax(lp16_np, -1), -1)
    assert np.array_equal(bs16_np, self_signs)
    # ... agree with the f32 reference wherever the decision margin exceeds bf16
    # noise, and be -1 at masked positions.
    srt = np.sort(ref_logp, -1)
    confident = ((srt[..., -1] - srt[..., -2]) > 5e-2) & (mask_np != 0)
    assert np.array_equal(bs16_np[confident], ref_signs[confident])
    assert np.all(bs16_np[mask_np == 0] == -1)

    print("KERNEL_OK")
</pallas_src>

<mosaic_0001>
module attributes {stable_mosaic.version = 11 : i64} {
  func.func @kernel(%arg0: i32, %arg1: i32, %arg2: memref<1x8x128xf32, #tpu.memory_space<vmem>>, %arg3: memref<1x1x128xf32, #tpu.memory_space<vmem>>, %arg4: memref<128x128xf32, #tpu.memory_space<vmem>>, %arg5: memref<2x128xf32, #tpu.memory_space<vmem>>, %arg6: memref<128x128xf32, #tpu.memory_space<vmem>>, %arg7: memref<1x128xf32, #tpu.memory_space<vmem>>, %arg8: memref<1x8x128xf32, #tpu.memory_space<vmem>>) attributes {dimension_semantics = [#tpu.dimension_semantics<parallel>, #tpu.dimension_semantics<parallel>], iteration_bounds = array<i64: 2, 1>, scalar_prefetch = 0 : i64, scratch_operands = 0 : i64, tpu.core_type = #tpu.core_type<tc>, window_params = [{transform_indices = @transform_0, window_bounds = array<i64: 1, 8, 128>}, {transform_indices = @transform_1, window_bounds = array<i64: 1, 1, 128>}, {pipeline_mode = #tpu.pipeline_mode<synchronous>, transform_indices = @transform_2, window_bounds = array<i64: 128, 128>}, {pipeline_mode = #tpu.pipeline_mode<synchronous>, transform_indices = @transform_3, window_bounds = array<i64: 2, 128>}, {pipeline_mode = #tpu.pipeline_mode<synchronous>, transform_indices = @transform_4, window_bounds = array<i64: 128, 128>}, {pipeline_mode = #tpu.pipeline_mode<synchronous>, transform_indices = @transform_5, window_bounds = array<i64: 1, 128>}, {transform_indices = @transform_6, window_bounds = array<i64: 1, 8, 128>}]} {
    %c0 = arith.constant 0 : index
    %c0_0 = arith.constant 0 : index
    %c0_1 = arith.constant 0 : index
    %0 = vector.load %arg2[%c0, %c0_0, %c0_1] : memref<1x8x128xf32, #tpu.memory_space<vmem>>, vector<1x8x128xf32>
    %1 = vector.shape_cast %0 : vector<1x8x128xf32> to vector<8x128xf32>
    %c0_2 = arith.constant 0 : index
    %c0_3 = arith.constant 0 : index
    %2 = vector.load %arg4[%c0_2, %c0_3] : memref<128x128xf32, #tpu.memory_space<vmem>>, vector<128x128xf32>
    %cst = arith.constant dense<0.000000e+00> : vector<8x128xf32>
    %3 = tpu.matmul %1, %2, %cst {dimension_numbers = #tpu.dot_dimension_numbers<[1], [0], [0], [1], [0, 0, 1, 1], [], []>} : vector<8x128xf32>, vector<128x128xf32>, vector<8x128xf32> -> vector<8x128xf32>
    %c0_4 = arith.constant 0 : index
    %c0_5 = arith.constant 0 : index
    %c0_6 = arith.constant 0 : index
    %4 = vector.load %arg3[%c0_4, %c0_5, %c0_6] : memref<1x1x128xf32, #tpu.memory_space<vmem>>, vector<1x1x128xf32>
    %5 = vector.shape_cast %4 : vector<1x1x128xf32> to vector<1x128xf32>
    %6 = vector.broadcast %5 : vector<1x128xf32> to vector<8x128xf32>
    %7 = arith.addf %3, %6 : vector<8x128xf32>
    %cst_7 = arith.constant 5.000000e-01 : f32
    %8 = vector.broadcast %cst_7 : f32 to vector<8x128xf32>
    %9 = arith.mulf %8, %7 : vector<8x128xf32>
    %cst_8 = arith.constant 4.471500e-02 : f32
    %10 = vector.broadcast %cst_8 : f32 to vector<8x128xf32>
    %11 = arith.mulf %10, %7 : vector<8x128xf32>
    %12 = arith.mulf %11, %7 : vector<8x128xf32>
    %13 = arith.mulf %12, %7 : vector<8x128xf32>
    %14 = arith.addf %7, %13 : vector<8x128xf32>
    %cst_9 = arith.constant 0.797884583 : f32
    %15 = vector.broadcast %cst_9 : f32 to vector<8x128xf32>
    %16 = arith.mulf %15, %14 : vector<8x128xf32>
    %17 = math.tanh %16 : vector<8x128xf32>
    %cst_10 = arith.constant 1.000000e+00 : f32
    %18 = vector.broadcast %cst_10 : f32 to vector<8x128xf32>
    %19 = arith.addf %18, %17 : vector<8x128xf32>
    %20 = arith.mulf %9, %19 : vector<8x128xf32>
    %cst_11 = arith.constant dense<0.000000e+00> : vector<8xf32>
    %21 = vector.multi_reduction <add>, %20, %cst_11 [1] : vector<8x128xf32> to vector<8xf32>
    %22 = vector.shape_cast %21 : vector<8xf32> to vector<8x1xf32>
    %cst_12 = arith.constant 3.125000e-02 : f32
    %23 = vector.broadcast %cst_12 : f32 to vector<8x1xf32>
    %24 = arith.mulf %22, %23 : vector<8x1xf32>
    %25 = vector.broadcast %24 : vector<8x1xf32> to vector<8x128xf32>
    %26 = arith.subf %20, %25 : vector<8x128xf32>
    %27 = tpu.iota {dimensions = array<i32: 1>} : vector<8x128xi32>
    %c32_i32 = arith.constant 32 : i32
    %28 = vector.broadcast %c32_i32 : i32 to vector<8x128xi32>
    %29 = arith.cmpi slt, %27, %28 : vector<8x128xi32>
    %cst_13 = arith.constant 0.000000e+00 : f32
    %30 = vector.broadcast %cst_13 : f32 to vector<8x128xf32>
    %31 = arith.select %29, %26, %30 : vector<8x128xi1>, vector<8x128xf32>
    %32 = arith.mulf %31, %31 : vector<8x128xf32>
    %cst_14 = arith.constant dense<0.000000e+00> : vector<8xf32>
    %33 = vector.multi_reduction <add>, %32, %cst_14 [1] : vector<8x128xf32> to vector<8xf32>
    %34 = vector.shape_cast %33 : vector<8xf32> to vector<8x1xf32>
    %cst_15 = arith.constant 3.125000e-02 : f32
    %35 = vector.broadcast %cst_15 : f32 to vector<8x1xf32>
    %36 = arith.mulf %34, %35 : vector<8x1xf32>
    %37 = vector.broadcast %24 : vector<8x1xf32> to vector<8x128xf32>
    %38 = arith.subf %20, %37 : vector<8x128xf32>
    %cst_16 = arith.constant 9.99999974E-6 : f32
    %39 = vector.broadcast %cst_16 : f32 to vector<8x1xf32>
    %40 = arith.addf %36, %39 : vector<8x1xf32>
    %41 = math.rsqrt %40 : vector<8x1xf32>
    %42 = vector.broadcast %41 : vector<8x1xf32> to vector<8x128xf32>
    %43 = arith.mulf %38, %42 : vector<8x128xf32>
    %c0_17 = arith.constant 0 : index
    %c0_18 = arith.constant 0 : index
    %44 = vector.load %arg5[%c0_17, %c0_18] : memref<2x128xf32, #tpu.memory_space<vmem>>, vector<1x128xf32>
    %45 = vector.broadcast %44 : vector<1x128xf32> to vector<8x128xf32>
    %46 = arith.mulf %43, %45 : vector<8x128xf32>
    %c1 = arith.constant 1 : index
    %c0_19 = arith.constant 0 : index
    %47 = vector.load %arg5[%c1, %c0_19] : memref<2x128xf32, #tpu.memory_space<vmem>>, vector<1x128xf32>
    %48 = vector.broadcast %47 : vector<1x128xf32> to vector<8x128xf32>
    %49 = arith.addf %46, %48 : vector<8x128xf32>
    %c0_20 = arith.constant 0 : index
    %c0_21 = arith.constant 0 : index
    %50 = vector.load %arg6[%c0_20, %c0_21] : memref<128x128xf32, #tpu.memory_space<vmem>>, vector<128x128xf32>
    %cst_22 = arith.constant dense<0.000000e+00> : vector<8x128xf32>
    %51 = tpu.matmul %49, %50, %cst_22 {dimension_numbers = #tpu.dot_dimension_numbers<[1], [0], [0], [1], [0, 0, 1, 1], [], []>} : vector<8x128xf32>, vector<128x128xf32>, vector<8x128xf32> -> vector<8x128xf32>
    %c0_23 = arith.constant 0 : index
    %c0_24 = arith.constant 0 : index
    %52 = vector.load %arg7[%c0_23, %c0_24] : memref<1x128xf32, #tpu.memory_space<vmem>>, vector<1x128xf32>
    %53 = vector.broadcast %52 : vector<1x128xf32> to vector<8x128xf32>
    %54 = arith.addf %51, %53 : vector<8x128xf32>
    %55 = tpu.iota {dimensions = array<i32: 1>} : vector<8x128xi32>
    %c4_i32 = arith.constant 4 : i32
    %56 = vector.broadcast %c4_i32 : i32 to vector<8x128xi32>
    %57 = arith.cmpi slt, %55, %56 : vector<8x128xi32>
    %cst_25 = arith.constant -1.000000e+30 : f32
    %58 = vector.broadcast %cst_25 : f32 to vector<8x128xf32>
    %59 = arith.select %57, %54, %58 : vector<8x128xi1>, vector<8x128xf32>
    %cst_26 = arith.constant dense<0xFF800000> : vector<8xf32>
    %60 = vector.multi_reduction <maximumf>, %59, %cst_26 [1] : vector<8x128xf32> to vector<8xf32>
    %61 = vector.shape_cast %60 : vector<8xf32> to vector<8x1xf32>
    %62 = vector.broadcast %61 : vector<8x1xf32> to vector<8x128xf32>
    %63 = arith.subf %59, %62 : vector<8x128xf32>
    %64 = math.exp %63 : vector<8x128xf32>
    %cst_27 = arith.constant dense<0.000000e+00> : vector<8xf32>
    %65 = vector.multi_reduction <add>, %64, %cst_27 [1] : vector<8x128xf32> to vector<8xf32>
    %66 = vector.shape_cast %65 : vector<8xf32> to vector<8x1xf32>
    %67 = math.log %66 : vector<8x1xf32>
    %68 = arith.addf %61, %67 : vector<8x1xf32>
    %69 = vector.broadcast %68 : vector<8x1xf32> to vector<8x128xf32>
    %70 = arith.subf %54, %69 : vector<8x128xf32>
    %71 = vector.broadcast %61 : vector<8x1xf32> to vector<8x128xf32>
    %72 = arith.cmpf oge, %59, %71 : vector<8x128xf32>
    %c128_i32 = arith.constant 128 : i32
    %73 = vector.broadcast %c128_i32 : i32 to vector<8x128xi32>
    %74 = arith.select %72, %55, %73 : vector<8x128xi1>, vector<8x128xi32>
    %cst_28 = arith.constant dense<2147483647> : vector<8xi32>
    %75 = vector.multi_reduction <minsi>, %74, %cst_28 [1] : vector<8x128xi32> to vector<8xi32>
    %76 = vector.shape_cast %75 : vector<8xi32> to vector<8x1xi32>
    %c4_i32_29 = arith.constant 4 : i32
    %77 = vector.broadcast %c4_i32_29 : i32 to vector<8x128xi32>
    %78 = arith.cmpi eq, %55, %77 : vector<8x128xi32>
    %79 = arith.sitofp %76 : vector<8x1xi32> to vector<8x1xf32>
    %80 = vector.shape_cast %79 : vector<8x1xf32> to vector<8x1xf32>
    %81 = vector.broadcast %80 : vector<8x1xf32> to vector<8x128xf32>
    %82 = arith.select %78, %81, %70 : vector<8x128xi1>, vector<8x128xf32>
    %c0_30 = arith.constant 0 : index
    %c0_31 = arith.constant 0 : index
    %c0_32 = arith.constant 0 : index
    %83 = vector.load %arg8[%c0_30, %c0_31, %c0_32] : memref<1x8x128xf32, #tpu.memory_space<vmem>>, vector<1x8x128xf32>
    %84 = vector.shape_cast %83 : vector<1x8x128xf32> to vector<8x128xf32>
    %85 = vector.shape_cast %82 : vector<8x128xf32> to vector<1x8x128xf32>
    tpu.vector_store %arg8[%c0_30, %c0_31, %c0_32], %85 {strides = array<i32>} : memref<1x8x128xf32, #tpu.memory_space<vmem>>, vector<1x8x128xf32>,
    return
  }
  func.func @transform_0(%arg0: i32, %arg1: i32) -> (i32, i32, i32) {
    %c0_i32 = arith.constant 0 : i32
    %c0_i32_0 = arith.constant 0 : i32
    return %arg0, %arg1, %c0_i32 : i32, i32, i32
  }
  func.func @transform_1(%arg0: i32, %arg1: i32) -> (i32, i32, i32) {
    %c0_i32 = arith.constant 0 : i32
    %c0_i32_0 = arith.constant 0 : i32
    %c0_i32_1 = arith.constant 0 : i32
    return %arg0, %c0_i32, %c0_i32_0 : i32, i32, i32
  }
  func.func @transform_2(%arg0: i32, %arg1: i32) -> (i32, i32) {
    %c0_i32 = arith.constant 0 : i32
    %c0_i32_0 = arith.constant 0 : i32
    %c0_i32_1 = arith.constant 0 : i32
    return %c0_i32, %c0_i32_0 : i32, i32
  }
  func.func @transform_3(%arg0: i32, %arg1: i32) -> (i32, i32) {
    %c0_i32 = arith.constant 0 : i32
    %c0_i32_0 = arith.constant 0 : i32
    %c0_i32_1 = arith.constant 0 : i32
    return %c0_i32, %c0_i32_0 : i32, i32
  }
  func.func @transform_4(%arg0: i32, %arg1: i32) -> (i32, i32) {
    %c0_i32 = arith.constant 0 : i32
    %c0_i32_0 = arith.constant 0 : i32
    %c0_i32_1 = arith.constant 0 : i32
    return %c0_i32, %c0_i32_0 : i32, i32
  }
  func.func @transform_5(%arg0: i32, %arg1: i32) -> (i32, i32) {
    %c0_i32 = arith.constant 0 : i32
    %c0_i32_0 = arith.constant 0 : i32
    %c0_i32_1 = arith.constant 0 : i32
    return %c0_i32, %c0_i32_0 : i32, i32
  }
  func.func @transform_6(%arg0: i32, %arg1: i32) -> (i32, i32, i32) {
    %c0_i32 = arith.constant 0 : i32
    %c0_i32_0 = arith.constant 0 : i32
    return %arg0, %arg1, %c0_i32 : i32, i32, i32
  }
}

</mosaic_0001>

<llo_original>
// kernel: division_block_forward.1
$region0: #{division_block_forward.1}
  #allocation0 [shape = 'u32[]', space=smem, size = 0x4, offset = 0x4, fixed_abs, tag = 'smem constant byte address 0x4 - core index']
  #allocation1 [shape = 'u32[72,128]{1,0:T(1,128)}', space=vmem, size = 0x9000, scoped, tag = 'internal scratch']
  %s0 = inlined_call_operand.vmem [shape: f32[2,8,128], index: 0, kind: input, shape index: {}]
  %s1 = inlined_call_operand.vmem [shape: f32[2,1,128], index: 1, kind: input, shape index: {}]
  %s2 = inlined_call_operand.hbm [shape: f32[128,128], index: 2, kind: input, shape index: {}]
  %s3 = inlined_call_operand.vmem [shape: f32[2,128], index: 3, kind: input, shape index: {}]
  %s4 = inlined_call_operand.hbm [shape: f32[128,128], index: 4, kind: input, shape index: {}]
  %s5 = inlined_call_operand.vmem [shape: f32[1,128], index: 5, kind: input, shape index: {}]
  %s6 = inlined_call_operand.vmem [shape: f32[2,8,128], index: 6, kind: output, shape index: {}]
  %s7 = sld [smem:[#allocation0]]
  $region65: #{division_block_forward.1} parent=0
    _
  %s9 = ssub.s32 1, %s7
  %s10 = scalar_select 0, %s9, %s7
  $region1: #{division_block_forward.1} parent=0
    #allocation2 [shape = 'u8[65536]{0}', space=vmem, size = 0x10000, scoped, tag = 'input window, operand 2, single buffered']
    #allocation3 [shape = 's32[2]{0}', space=sflag, size = 0x8, scoped, tag = 'scoped memory for division_block_forward.1']
    #allocation4 [shape = 'u8[65536]{0}', space=vmem, size = 0x10000, scoped, tag = 'input window, operand 4, single buffered']
    #allocation5 [shape = 's32[1]{0}', space=sflag, size = 0x4, scoped, tag = 'scoped memory for division_block_forward.1']
    %11 = vsyncpa [#allocation3], 0
    %12 = vsyncpa [#allocation5], 0
    loop: start=0, step=1, limit=4
    $region2: #{division_block_forward.1} parent=1 // loop_pre_header
      _
    $region3: #{division_block_forward.1} parent=1 // loop_header
      %s14 = sphi 0, %s18
      %p15 = scmp.ge.s32.totalorder %s14, 4
      %s21 = sphi 0, %s33
      %s22 = sphi 0, %s29
      %s23 = sphi 0, %s21
      %s24 = sphi 0, %s22
      %s25 = sphi 0, %s23
      %s26 = sphi 0, %s24
      %s38 = sphi 0, %s40
      %s41 = sphi 0, %s38
      %s42 = sphi 0, %s41
      %s58 = sphi 0, %s42
      %s64 = sphi 0, %s66
      %s67 = sphi 0, %s64
      %s68 = sphi 0, %s67
      %s84 = sphi 0, %s68
      %s88 = sphi 0, %s88
      %s90 = sphi 0, %s88
      %s91 = sphi 0, %s90
      %s105 = sphi 0, %s91
      %s109 = sphi 0, %s109
      %s111 = sphi 0, %s109
      %s112 = sphi 0, %s111
      %s126 = sphi 0, %s112
      %s130 = sphi 0, %s130
      %s132 = sphi 0, %s130
      %s133 = sphi 0, %s132
      %s147 = sphi 0, %s133
      %s151 = sphi 0, %s151
      %s153 = sphi 0, %s151
      %s154 = sphi 0, %s153
      %s168 = sphi 0, %s154
      %s176 = sphi 0, %s178
      %s179 = sphi 0, %s176
      %s180 = sphi 0, %s179
      %s196 = sphi 0, %s180
    $region4: #{division_block_forward.1} parent=1 // loop_header_branch
      %17 = sbr.rel (%p15) target = $region8
    $region5: #{division_block_forward.1} parent=1 // loop_body
      %s19 = ssub.s32 %s14, 1
      %s20 = ssub.s32 %s14, 2
      %s27 = sadd.s32 1, %s22
      %p28 = scmp.ge.s32.totalorder %s27, 1
      %s29 = scalar_select %p28, 0, %s27
      %s30 = sadd.s32 1, %s21
      %s31 = scalar_select %p28, %s30, %s21
      %p32 = scmp.ge.s32.totalorder %s31, 2
      %s33 = scalar_select %p32, 0, %s31
      %s34 = ssub.s32 %s21, %s33
      %s35 = ssub.s32 %s22, %s29
      %s36 = sor.u32 %s34, %s35
      %p37 = scmp.eq.s32.totalorder %s36, 0
      %s39 = sadd.s32 %s38, 1
      %s40 = scalar_select %p37, %s38, %s39
      %p43 = pneg %p37
      %p44 = scmp.eq.s32.totalorder %s14, 1
      %p45 = por %p43, %p44
      %p46 = scmp.ne.s32.totalorder %s38, %s41
      %p47 = scmp.eq.s32.totalorder %s14, 0
      %p48 = por %p46, %p47
      %p49 = scmp.ne.s32.totalorder %s38, %s41
      %p50 = scmp.eq.s32.totalorder %s19, 1
      %p51 = por %p49, %p50
      %p52 = scmp.ne.s32.totalorder %s41, %s42
      %p53 = scmp.eq.s32.totalorder %s19, 0
      %p54 = por %p52, %p53
      %p55 = scmp.ne.s32.totalorder %s41, %s42
      %p56 = scmp.eq.s32.totalorder %s20, 1
      %p57 = por %p55, %p56
      %p59 = scmp.ne.s32.totalorder %s42, %s58
      %p60 = scmp.eq.s32.totalorder %s20, 0
      %p61 = por %p59, %p60
      %s62 = ssub.s32 %s21, %s33
      %p63 = scmp.eq.s32.totalorder %s62, 0
      %s65 = sadd.s32 %s64, 1
      %s66 = scalar_select %p63, %s64, %s65
      %p69 = pneg %p63
      %p70 = scmp.eq.s32.totalorder %s14, 1
      %p71 = por %p69, %p70
      %p72 = scmp.ne.s32.totalorder %s64, %s67
      %p73 = scmp.eq.s32.totalorder %s14, 0
      %p74 = por %p72, %p73
      %p75 = scmp.ne.s32.totalorder %s64, %s67
      %p76 = scmp.eq.s32.totalorder %s19, 1
      %p77 = por %p75, %p76
      %p78 = scmp.ne.s32.totalorder %s67, %s68
      %p79 = scmp.eq.s32.totalorder %s19, 0
      %p80 = por %p78, %p79
      %p81 = scmp.ne.s32.totalorder %s67, %s68
      %p82 = scmp.eq.s32.totalorder %s20, 1
      %p83 = por %p81, %p82
      %p85 = scmp.ne.s32.totalorder %s68, %s84
      %p86 = scmp.eq.s32.totalorder %s20, 0
      %p87 = por %p85, %p86
      %s89 = sadd.s32 %s88, 1
      %p92 = scmp.eq.s32.totalorder %s14, 1
      %p93 = scmp.ne.s32.totalorder %s88, %s90
      %p94 = scmp.eq.s32.totalorder %s14, 0
      %p95 = por %p93, %p94
      %p96 = scmp.ne.s32.totalorder %s88, %s90
      %p97 = scmp.eq.s32.totalorder %s19, 1
      %p98 = por %p96, %p97
      %p99 = scmp.ne.s32.totalorder %s90, %s91
      %p100 = scmp.eq.s32.totalorder %s19, 0
      %p101 = por %p99, %p100
      %p102 = scmp.ne.s32.totalorder %s90, %s91
      %p103 = scmp.eq.s32.totalorder %s20, 1
      %p104 = por %p102, %p103
      %p106 = scmp.ne.s32.totalorder %s91, %s105
      %p107 = scmp.eq.s32.totalorder %s20, 0
      %p108 = por %p106, %p107
      %s110 = sadd.s32 %s109, 1
      %p113 = scmp.eq.s32.totalorder %s14, 1
      %p114 = scmp.ne.s32.totalorder %s109, %s111
      %p115 = scmp.eq.s32.totalorder %s14, 0
      %p116 = por %p114, %p115
      %p117 = scmp.ne.s32.totalorder %s109, %s111
      %p118 = scmp.eq.s32.totalorder %s19, 1
      %p119 = por %p117, %p118
      %p120 = scmp.ne.s32.totalorder %s111, %s112
      %p121 = scmp.eq.s32.totalorder %s19, 0
      %p122 = por %p120, %p121
      %p123 = scmp.ne.s32.totalorder %s111, %s112
      %p124 = scmp.eq.s32.totalorder %s20, 1
      %p125 = por %p123, %p124
      %p127 = scmp.ne.s32.totalorder %s112, %s126
      %p128 = scmp.eq.s32.totalorder %s20, 0
      %p129 = por %p127, %p128
      %s131 = sadd.s32 %s130, 1
      %p134 = scmp.eq.s32.totalorder %s14, 1
      %p135 = scmp.ne.s32.totalorder %s130, %s132
      %p136 = scmp.eq.s32.totalorder %s14, 0
      %p137 = por %p135, %p136
      %p138 = scmp.ne.s32.totalorder %s130, %s132
      %p139 = scmp.eq.s32.totalorder %s19, 1
      %p140 = por %p138, %p139
      %p141 = scmp.ne.s32.totalorder %s132, %s133
      %p142 = scmp.eq.s32.totalorder %s19, 0
      %p143 = por %p141, %p142
      %p144 = scmp.ne.s32.totalorder %s132, %s133
      %p145 = scmp.eq.s32.totalorder %s20, 1
      %p146 = por %p144, %p145
      %p148 = scmp.ne.s32.totalorder %s133, %s147
      %p149 = scmp.eq.s32.totalorder %s20, 0
      %p150 = por %p148, %p149
      %s152 = sadd.s32 %s151, 1
      %p155 = scmp.eq.s32.totalorder %s14, 1
      %p156 = scmp.ne.s32.totalorder %s151, %s153
      %p157 = scmp.eq.s32.totalorder %s14, 0
      %p158 = por %p156, %p157
      %p159 = scmp.ne.s32.totalorder %s151, %s153
      %p160 = scmp.eq.s32.totalorder %s19, 1
      %p161 = por %p159, %p160
      %p162 = scmp.ne.s32.totalorder %s153, %s154
      %p163 = scmp.eq.s32.totalorder %s19, 0
      %p164 = por %p162, %p163
      %p165 = scmp.ne.s32.totalorder %s153, %s154
      %p166 = scmp.eq.s32.totalorder %s20, 1
      %p167 = por %p165, %p166
      %p169 = scmp.ne.s32.totalorder %s154, %s168
      %p170 = scmp.eq.s32.totalorder %s20, 0
      %p171 = por %p169, %p170
      %s172 = ssub.s32 %s21, %s33
      %s173 = ssub.s32 %s22, %s29
      %s174 = sor.u32 %s172, %s173
      %p175 = scmp.eq.s32.totalorder %s174, 0
      %s177 = sadd.s32 %s176, 1
      %s178 = scalar_select %p175, %s176, %s177
      %p181 = pneg %p175
      %p182 = scmp.eq.s32.totalorder %s14, 1
      %p183 = por %p181, %p182
      %p184 = scmp.ne.s32.totalorder %s176, %s179
      %p185 = scmp.eq.s32.totalorder %s14, 0
      %p186 = por %p184, %p185
      %p187 = scmp.ne.s32.totalorder %s176, %s179
      %p188 = scmp.eq.s32.totalorder %s19, 1
      %p189 = por %p187, %p188
      %p190 = scmp.ne.s32.totalorder %s179, %s180
      %p191 = scmp.eq.s32.totalorder %s19, 0
      %p192 = por %p190, %p191
      %p193 = scmp.ne.s32.totalorder %s179, %s180
      %p194 = scmp.eq.s32.totalorder %s20, 1
      %p195 = por %p193, %p194
      %p197 = scmp.ne.s32.totalorder %s180, %s196
      %p198 = scmp.eq.s32.totalorder %s20, 0
      %p199 = por %p197, %p198
      %p200 = scmp.le.s32.totalorder 1, %s14
      %p201 = scmp.lt.s32.totalorder %s14, 3
      %p202 = pnand %p200, %p201
      %p203 = pneg %p202
      // Predicated region
      $region9: #{division_block_forward.1} parent=5 // pred_check
        _
      $region10: #{division_block_forward.1} parent=5 // pred_check_branch
        %205 = sbr.rel (%p202) target = $region12
      $region11: #{division_block_forward.1} parent=5 // pred_region
        %s206 = ssub.s32 %s14, 1
        // Predicated region
        $region13: #{division_block_forward.1} parent=11 // pred_check
          %p207 = pneg %p101
        $region14: #{division_block_forward.1} parent=11 // pred_check_branch
          %209 = sbr.rel (%p207) target = $region16
        $region15: #{division_block_forward.1} parent=11 // pred_region
          %211 = vsyncadd [#allocation3], 0
          %s212 = sshll.u32 %s2, 4
          %s213 = int_to_ptr.hbm [resolvable:$true] %s212
          %s214 = sshll.u32 [#allocation2], 4
          %s215 = int_to_ptr.vmem [resolvable:$true] %s214
          %220 = dma.hbm_to_vmem [thread:$0]  %s213, 2048, %s215, [#allocation3], 128, 128, 8
        $region16: #{division_block_forward.1} parent=11 // pred_fallthru
          _
        // Predicated region
        $region17: #{division_block_forward.1} parent=11 // pred_check
          %p221 = pneg %p122
        $region18: #{division_block_forward.1} parent=11 // pred_check_branch
          %223 = sbr.rel (%p221) target = $region20
        $region19: #{division_block_forward.1} parent=11 // pred_region
          _
        $region20: #{division_block_forward.1} parent=11 // pred_fallthru
          _
        // Predicated region
        $region21: #{division_block_forward.1} parent=11 // pred_check
          %p224 = pneg %p143
        $region22: #{division_block_forward.1} parent=11 // pred_check_branch
          %226 = sbr.rel (%p224) target = $region24
        $region23: #{division_block_forward.1} parent=11 // pred_region
          %228 = vsyncadd [#allocation5], 0
          %s229 = sshll.u32 %s4, 4
          %s230 = int_to_ptr.hbm [resolvable:$true] %s229
          %s231 = sshll.u32 [#allocation4], 4
          %s232 = int_to_ptr.vmem [resolvable:$true] %s231
          %237 = dma.hbm_to_vmem [thread:$0]  %s230, 2048, %s232, [#allocation5], 128, 128, 8
        $region24: #{division_block_forward.1} parent=11 // pred_fallthru
          _
        // Predicated region
        $region25: #{division_block_forward.1} parent=11 // pred_check
          %p238 = pneg %p164
        $region26: #{division_block_forward.1} parent=11 // pred_check_branch
          %240 = sbr.rel (%p238) target = $region28
        $region27: #{division_block_forward.1} parent=11 // pred_region
          _
        $region28: #{division_block_forward.1} parent=11 // pred_fallthru
          _
      $region12: #{division_block_forward.1} parent=5 // pred_fallthru
        _
      %p241 = scmp.lt.s32.totalorder %s14, 2
      // Predicated region
      $region29: #{division_block_forward.1} parent=5 // pred_check
        %p242 = pneg %p241
      $region30: #{division_block_forward.1} parent=5 // pred_check_branch
        %244 = sbr.rel (%p242) target = $region32
      $region31: #{division_block_forward.1} parent=5 // pred_region
        // Predicated region
        $region33: #{division_block_forward.1} parent=31 // pred_check
          %p245 = pneg %p48
        $region34: #{division_block_forward.1} parent=31 // pred_check_branch
          %247 = sbr.rel (%p245) target = $region36
        $region35: #{division_block_forward.1} parent=31 // pred_region
          %p248 = scmp.lt.s32.totalorder %s21, 1
          %s249 = scalar_select %p248, %s21, 1
          %p250 = scmp.lt.s32.totalorder %s22, 0
          %s251 = scalar_select %p250, %s22, 0
          %s252 = sadd.s32 %s251, %s249
          %s253 = smul.addr %s252, 8
          %s254 = scalar_lea.vmem %s0, %s253
        $region36: #{division_block_forward.1} parent=31 // pred_fallthru
          _
        // Predicated region
        $region37: #{division_block_forward.1} parent=31 // pred_check
          %p255 = pneg %p74
        $region38: #{division_block_forward.1} parent=31 // pred_check_branch
          %257 = sbr.rel (%p255) target = $region40
        $region39: #{division_block_forward.1} parent=31 // pred_region
          %p258 = scmp.lt.s32.totalorder %s21, 1
          %s259 = scalar_select %p258, %s21, 1
          %s260 = scalar_lea.vmem %s1, %s259
        $region40: #{division_block_forward.1} parent=31 // pred_fallthru
          _
      $region32: #{division_block_forward.1} parent=5 // pred_fallthru
        _
      %p261 = scmp.le.s32.totalorder 1, %s14
      %p262 = scmp.lt.s32.totalorder %s14, 3
      %p263 = pnand %p261, %p262
      %p264 = pneg %p263
      // Predicated region
      $region41: #{division_block_forward.1} parent=5 // pred_check
        _
      $region42: #{division_block_forward.1} parent=5 // pred_check_branch
        %266 = sbr.rel (%p263) target = $region44
      $region43: #{division_block_forward.1} parent=5 // pred_region
        %s267 = ssub.s32 %s14, 1
        // Predicated region
        $region45: #{division_block_forward.1} parent=43 // pred_check
          %p268 = pneg %p101
        $region46: #{division_block_forward.1} parent=43 // pred_check_branch
          %270 = sbr.rel (%p268) target = $region48
        $region47: #{division_block_forward.1} parent=43 // pred_region
          %272 = dma.done [#allocation3], 2048
        $region48: #{division_block_forward.1} parent=43 // pred_fallthru
          _
        // Predicated region
        $region49: #{division_block_forward.1} parent=43 // pred_check
          %p273 = pneg %p143
        $region50: #{division_block_forward.1} parent=43 // pred_check_branch
          %275 = sbr.rel (%p273) target = $region52
        $region51: #{division_block_forward.1} parent=43 // pred_region
          %277 = dma.done [#allocation5], 2048
        $region52: #{division_block_forward.1} parent=43 // pred_fallthru
          _
        %p278 = scmp.lt.s32.totalorder %s23, 1
        %s279 = scalar_select %p278, %s23, 1
        %p280 = scmp.lt.s32.totalorder %s24, 0
        %s281 = scalar_select %p280, %s24, 0
        %s282 = sadd.s32 %s281, %s279
        %s283 = smul.addr %s282, 8
        %s284 = scalar_lea.vmem %s0, %s283
        %p285 = pneg %p54
        %p286 = pneg %p51
        %p287 = scmp.lt.s32.totalorder %s23, 1
        %s288 = scalar_select %p287, %s23, 1
        %s289 = scalar_lea.vmem %s1, %s288
        %p290 = pneg %p80
        %p291 = pneg %p77
        %p292 = pneg %p101
        %p293 = pneg %p98
        %p294 = pneg %p122
        %p295 = pneg %p119
        %p296 = pneg %p143
        %p297 = pneg %p140
        %p298 = pneg %p164
        %p299 = pneg %p161
        %p300 = pneg %p192
        %p301 = pneg %p189
        %p302 = scmp.lt.s32.totalorder %s23, 1
        %s303 = scalar_select %p302, %s23, 1
        %p304 = scmp.lt.s32.totalorder %s24, 0
        %s305 = scalar_select %p304, %s24, 0
        %s306 = sadd.s32 %s305, %s303
        %s307 = smul.addr %s306, 8
        %s308 = scalar_lea.vmem %s6, %s307
        %p309 = scmp.lt.s32.totalorder %s23, 1
        %s310 = scalar_select %p309, %s23, 1
        %p311 = scmp.lt.s32.totalorder %s24, 0
        %s312 = scalar_select %p311, %s24, 0
        %s313 = sadd.s32 %s312, %s310
        %s314 = smul.addr %s313, 8
        %s315 = scalar_lea.vmem %s0, %s314
        %p316 = scmp.lt.s32.totalorder %s23, 1
        %s317 = scalar_select %p316, %s23, 1
        %s318 = scalar_lea.vmem %s1, %s317
        %p319 = scmp.lt.s32.totalorder %s23, 1
        %s320 = scalar_select %p319, %s23, 1
        %p321 = scmp.lt.s32.totalorder %s24, 0
        %s322 = scalar_select %p321, %s24, 0
        %s323 = sadd.s32 %s322, %s320
        %s324 = smul.addr %s323, 8
        %s325 = scalar_lea.vmem %s6, %s324
        %v326 = vld [vmem:[%s315] sm:$0xff]
        %v327 = vld [vmem:[#allocation2] sm:$0xff]
        %v328 = vld [vmem:[#allocation2 + $0x8] sm:$0xff]
        %v329 = vld [vmem:[#allocation2 + $0x10] sm:$0xff]
        %v330 = vld [vmem:[#allocation2 + $0x18] sm:$0xff]
        %v331 = vld [vmem:[#allocation2 + $0x20] sm:$0xff]
        %v332 = vld [vmem:[#allocation2 + $0x28] sm:$0xff]
        %v333 = vld [vmem:[#allocation2 + $0x30] sm:$0xff]
        %v334 = vld [vmem:[#allocation2 + $0x38] sm:$0xff]
        %v335 = vld [vmem:[#allocation2 + $0x40] sm:$0xff]
        %v336 = vld [vmem:[#allocation2 + $0x48] sm:$0xff]
        %v337 = vld [vmem:[#allocation2 + $0x50] sm:$0xff]
        %v338 = vld [vmem:[#allocation2 + $0x58] sm:$0xff]
        %v339 = vld [vmem:[#allocation2 + $0x60] sm:$0xff]
        %v340 = vld [vmem:[#allocation2 + $0x68] sm:$0xff]
        %v341 = vld [vmem:[#allocation2 + $0x70] sm:$0xff]
        %v342 = vld [vmem:[#allocation2 + $0x78] sm:$0xff]
        %v343 = vld [vmem:[%s318] sm:$0x1]
        %v345 = vperm.slane %v343, 0
        %347 = vmatpush.msra.mxu0 %v342
        %348 = vmatpush.msra.mxu0 %v341
        %349 = vmatpush.msra.mxu0 %v340
        %350 = vmatpush.msra.mxu0 %v339
        %351 = vmatpush.msra.mxu0 %v338
        %352 = vmatpush.msra.mxu0 %v337
        %353 = vmatpush.msra.mxu0 %v336
        %354 = vmatpush.msra.mxu0 %v335
        %355 = vmatpush.msra.mxu0 %v334
        %356 = vmatpush.msra.mxu0 %v333
        %357 = vmatpush.msra.mxu0 %v332
        %358 = vmatpush.msra.mxu0 %v331
        %359 = vmatpush.msra.mxu0 %v330
        %360 = vmatpush.msra.mxu0 %v329
        %361 = vmatpush.msra.mxu0 %v328
        %362 = vmatpush.msra.mxu0 %v327
        %363 = vmatmul.f32.gmra.mxu0 %v326
        %v364 = vpop.f32.mrf.mxu0
        %v365 = vadd.f32 %v345, %v364
        %366 = vdwg.mxu0
        %v367 = vmul.f32 %v365, 0.5
        %v368 = vmul.f32 %v365, 0.044715
        %v369 = vmul.f32 %v368, %v365
        %v370 = vmul.f32 %v369, %v365
        %v371 = vadd.f32 %v365, %v370
        %v372 = vmul.f32 %v371, 0.7978846
        %v373 = vtanh.pop %v372
        %v374 = vadd.f32 %v373, 1.0
        %v375 = vmul.f32 %v367, %v374
        %376 = vadd.xlane.f32.xlu0 %v375
        %v377 = vpop.xlane.xlu0 %376
        %v378 = vmul.f32 %v377, 0.03125
        %v379 = vsub.f32 %v375, %v378
        %v380 = vlaneseq
        %v381 = vand.u32 %v380, 127
        %vm382 = vcmp.lt.s32.totalorder %v381, 32
        %v383 = vsel %vm382, %v379, 0.0
        %v384 = vmul.f32 %v383, %v383
        %385 = vadd.xlane.f32.xlu0 %v384
        %v386 = vpop.xlane.xlu0 %385
        %v387 = vmul.f32 %v386, 0.03125
        %v388 = vadd.f32 %v387, 1e-05
        %v389 = vrsqrt.pop %v388
        %v390 = vmul.f32 %v389, %v388
        %v391 = vmul.f32 %v390, %v389
        %v392 = vmul.f32 0.5, %v391
        %v393 = vsub.f32 1.5, %v392
        %v394 = vmul.f32 %v389, %v393
        %vm395 = vweird.f32 %v388
        %vm396 = vweird.f32 %v389
        %vm397 = vmor %vm395, %vm396
        %v398 = vsel %vm397, %v389, %v394
        %v399 = vmul.f32 %v379, %v398
        %v400 = vld [vmem:[%s3] sm:$0x1]
        %v401 = vperm.slane %v400, 0
        %v402 = vmul.f32 %v399, %v401
        %v403 = vld [vmem:[%s3 + $0x1] sm:$0x1]
        %v404 = vperm.slane %v403, 0
        %v405 = vadd.f32 %v402, %v404
        %v406 = vld [vmem:[#allocation4] sm:$0xff]
        %v407 = vld [vmem:[#allocation4 + $0x8] sm:$0xff]
        %v408 = vld [vmem:[#allocation4 + $0x10] sm:$0xff]
        %v409 = vld [vmem:[#allocation4 + $0x18] sm:$0xff]
        %v410 = vld [vmem:[#allocation4 + $0x20] sm:$0xff]
        %v411 = vld [vmem:[#allocation4 + $0x28] sm:$0xff]
        %v412 = vld [vmem:[#allocation4 + $0x30] sm:$0xff]
        %v413 = vld [vmem:[#allocation4 + $0x38] sm:$0xff]
        %v414 = vld [vmem:[#allocation4 + $0x40] sm:$0xff]
        %v415 = vld [vmem:[#allocation4 + $0x48] sm:$0xff]
        %v416 = vld [vmem:[#allocation4 + $0x50] sm:$0xff]
        %v417 = vld [vmem:[#allocation4 + $0x58] sm:$0xff]
        %v418 = vld [vmem:[#allocation4 + $0x60] sm:$0xff]
        %v419 = vld [vmem:[#allocation4 + $0x68] sm:$0xff]
        %v420 = vld [vmem:[#allocation4 + $0x70] sm:$0xff]
        %v421 = vld [vmem:[#allocation4 + $0x78] sm:$0xff]
        %v422 = vld [vmem:[%s5] sm:$0x1]
        %v424 = vperm.slane %v422, 0
        %426 = vmatpush.msra.mxu0 %v421
        %427 = vmatpush.msra.mxu0 %v420
        %428 = vmatpush.msra.mxu0 %v419
        %429 = vmatpush.msra.mxu0 %v418
        %430 = vmatpush.msra.mxu0 %v417
        %431 = vmatpush.msra.mxu0 %v416
        %432 = vmatpush.msra.mxu0 %v415
        %433 = vmatpush.msra.mxu0 %v414
        %434 = vmatpush.msra.mxu0 %v413
        %435 = vmatpush.msra.mxu0 %v412
        %436 = vmatpush.msra.mxu0 %v411
        %437 = vmatpush.msra.mxu0 %v410
        %438 = vmatpush.msra.mxu0 %v409
        %439 = vmatpush.msra.mxu0 %v408
        %440 = vmatpush.msra.mxu0 %v407
        %441 = vmatpush.msra.mxu0 %v406
        %442 = vmatmul.f32.gmra.mxu0 %v405
        %v443 = vpop.f32.mrf.mxu0
        %v444 = vadd.f32 %v424, %v443
        %445 = vdwg.mxu0
        %vm446 = vcmp.lt.s32.totalorder %v381, 4
        %v447 = vsel %vm446, %v444, -1e+30
        %448 = vmax.xlane.f32.xlu0 %v447
        %v449 = vpop.xlane.xlu0 %448
        %v450 = vsub.f32 %v447, %v449
        %v451 = vmul.f32 %v450, 1.442695
        %v452 = vpow.pop %v451
        %453 = vadd.xlane.f32.xlu0 %v452
        %v454 = vpop.xlane.xlu0 %453
        %v455 = vlog2.pop %v454
        %v456 = vmul.f32 %v455, 0.6931472
        %v457 = vadd.f32 %v449, %v456
        %v458 = vsub.f32 %v444, %v457
        %vm459 = vcmp.ge.f32.partialorder %v447, %v449
        %v460 = vsel %vm459, %v381, 128
        %v461 = vand.u32 %v460, 65535
        %v462 = vshra.s32 %v460, 16
        %v463 = vcvt.s32.f32 %v461
        %v464 = vcvt.s32.f32 %v462
        %465 = vmin.xlane.f32.xlu0 %v464
        %v466 = vpop.xlane.xlu0 %465
        %vm467 = vcmp.eq.f32.partialorder %v464, %v466
        %v468 = vsel %vm467, %v463, inf
        %469 = vmin.xlane.f32.xlu0 %v468
        %v470 = vpop.xlane.xlu0 %469
        %v471 = vcvt.f32.s32 %v470
        %v472 = vcvt.f32.s32 %v466
        %v473 = vshll.u32 %v472, 16
        %v474 = vadd.s32 %v473, %v471
        %vm475 = vcmp.eq.s32.totalorder %v381, 4
        %v476 = vcvt.s32.f32 %v474
        %v477 = vsel %vm475, %v476, %v458
        %478 = vst [vmem:[%s325] sm:$0xff] %v477
        %p479 = scmp.lt.s32.totalorder %s23, 1
        %s480 = scalar_select %p479, %s23, 1
        %p481 = scmp.lt.s32.totalorder %s24, 0
        %s482 = scalar_select %p481, %s24, 0
        %s483 = sadd.s32 %s482, %s480
        %s484 = smul.addr %s483, 8
        %s485 = scalar_lea.vmem %s6, %s484
        // Predicated region
        $region53: #{division_block_forward.1} parent=43 // pred_check
          %p486 = pneg %p189
        $region54: #{division_block_forward.1} parent=43 // pred_check_branch
          %488 = sbr.rel (%p486) target = $region56
        $region55: #{division_block_forward.1} parent=43 // pred_region
          _
        $region56: #{division_block_forward.1} parent=43 // pred_fallthru
          _
      $region44: #{division_block_forward.1} parent=5 // pred_fallthru
        _
      %p489 = scmp.le.s32.totalorder 2, %s14
      // Predicated region
      $region57: #{division_block_forward.1} parent=5 // pred_check
        %p490 = pneg %p489
      $region58: #{division_block_forward.1} parent=5 // pred_check_branch
        %492 = sbr.rel (%p490) target = $region60
      $region59: #{division_block_forward.1} parent=5 // pred_region
        %s493 = ssub.s32 %s14, 2
        // Predicated region
        $region61: #{division_block_forward.1} parent=59 // pred_check
          %p494 = pneg %p195
        $region62: #{division_block_forward.1} parent=59 // pred_check_branch
          %496 = sbr.rel (%p494) target = $region64
        $region63: #{division_block_forward.1} parent=59 // pred_region
          %p497 = scmp.lt.s32.totalorder %s25, 1
          %s498 = scalar_select %p497, %s25, 1
          %p499 = scmp.lt.s32.totalorder %s26, 0
          %s500 = scalar_select %p499, %s26, 0
          %s501 = sadd.s32 %s500, %s498
          %s502 = smul.addr %s501, 8
          %s503 = scalar_lea.vmem %s6, %s502
        $region64: #{division_block_forward.1} parent=59 // pred_fallthru
          _
      $region60: #{division_block_forward.1} parent=5 // pred_fallthru
        _
    $region6: #{division_block_forward.1} parent=1 // loop_footer
      %s18 = sadd.s32 1, %s14
    $region7: #{division_block_forward.1} parent=1 // loop_footer_branch
      %13 = sbr.rel target = $region3
    $region8: #{division_block_forward.1} parent=1 // loop_exit
      _
    %504 = vsyncpa [#allocation3], 1
    %s505 = scalar_lea.sflag [#allocation3], 1
    %506 = vsyncpa %s505, 1
    %507 = vsyncpa [#allocation5], 1

</llo_original>
